<compile_context>
chip_gen: v5e
topology: v5e:2x2
jax: 0.10.0
libtpu: 0.0.40
codegen_flags: <defaults>
</compile_context>

<pallas_src>
from functools import partial

import numpy as np
import jax
import jax.numpy as jnp
from jax import lax
from jax.experimental import pallas as pl
from jax.experimental.pallas import tpu as pltpu

KSIZE = 3
SHIFT = 1.2


def _build_combined_weight(w1, w2):
    """Block-diagonal per-tap weight so conv1(x) and conv2(z) fuse into one matmul.

    w1: (Cout1, Cin1, K, K) OIHW, w2: (Cout2, Cin2, K, K) OIHW.
    Returns (Cout1 + Cout2, K*K*(Cin1 + Cin2)); column ordering matches the
    in-kernel LHS: for tap t = kh*K + kw, rows [t*(Cin1+Cin2) : ...] are the
    x-channels followed by the z-channels of that shifted window.
    """
    Cout1, Cin1 = w1.shape[0], w1.shape[1]
    Cout2, Cin2 = w2.shape[0], w2.shape[1]
    blocks = []
    for kh in range(KSIZE):
        for kw in range(KSIZE):
            top = jnp.concatenate(
                [w1[:, :, kh, kw], jnp.zeros((Cout1, Cin2), w1.dtype)], axis=1)
            bot = jnp.concatenate(
                [jnp.zeros((Cout2, Cin1), w2.dtype), w2[:, :, kh, kw]], axis=1)
            blocks.append(jnp.concatenate([top, bot], axis=0))
    return jnp.concatenate(blocks, axis=1)


def _build_border_mask(H, W, dtype):
    """(9, H*W) 0/1 validity mask for each of the 9 shifted taps (static, constant-folded)."""
    pad = KSIZE // 2
    hh, ww = np.meshgrid(np.arange(H), np.arange(W), indexing="ij")
    rows = []
    for kh in range(KSIZE):
        for kw in range(KSIZE):
            dh, dw = kh - pad, kw - pad
            valid = ((hh + dh >= 0) & (hh + dh < H) &
                     (ww + dw >= 0) & (ww + dw < W))
            rows.append(valid.reshape(-1).astype(np.float32))
    return jnp.asarray(np.stack(rows, axis=0), dtype=dtype)


def _make_kernel(H, W, Cout1, shift):
    HW = H * W
    pad = KSIZE // 2

    def kernel(x_ref, z_ref, w_ref, b1_ref, m_ref, out_ref):
        # x_ref: (Cin1, HW), z_ref: (Cin2, HW) -- channels on sublanes, spatial on lanes.
        # w_ref: (Cout1+Cout2, 9*(Cin1+Cin2)) block-diagonal fused weights (resident).
        # b1_ref: (Cout1, 1) conv1 bias (resident). m_ref: (9, HW) tap masks (resident).
        # out_ref: (Cout1, HW).
        xz = jnp.concatenate([x_ref[...], z_ref[...]], axis=0)      # (Ctot, HW)

        taps = []
        t = 0
        for kh in range(KSIZE):
            for kw in range(KSIZE):
                dh = kh - pad
                dw = kw - pad
                s = dh * W + dw
                # shifted[i] = xz[i + s] (circular); wrap positions are masked out.
                shifted = pltpu.roll(xz, shift=(-s) % HW, axis=1) if s != 0 else xz
                if dh != 0 or dw != 0:
                    shifted = shifted * m_ref[t:t + 1, :]            # broadcast (1, HW)
                taps.append(shifted)
                t += 1

        lhs = jnp.concatenate(taps, axis=0)                          # (9*Ctot, HW)
        acc = lax.dot_general(w_ref[...], lhs, (((1,), (0,)), ((), ())),
                              preferred_element_type=jnp.float32)    # (2*Cout, HW)

        y = jnp.maximum(acc[:Cout1, :] + b1_ref[...], 0.0)           # relu(conv1(x)+b1)
        out_ref[...] = (jnp.tanh(acc[Cout1:, :]) + y + shift).astype(out_ref.dtype)
        # TODO(synk): F.normalize(z, dim=2, p=norm) not implemented (module default norm=None).

    return kernel


@partial(jax.jit, static_argnames=("shift",))
def subhom_forward(z_nchw, x_nchw, w1, b1, w2, shift=SHIFT):
    """w1, w2 in PyTorch OIHW layout: (Cout, Cin, kh, kw); b1: (Cout,). NCHW throughout."""
    B, Cin1, H, W = x_nchw.shape
    Cin2 = z_nchw.shape[1]
    Cout1, Cout2 = w1.shape[0], w2.shape[0]
    assert Cout1 == Cout2, "conv1/conv2 output channels must match for the residual add"
    HW = H * W

    # Already channels-first (NCHW): just flatten spatial onto the lane axis (free).
    x2 = x_nchw.reshape(B, Cin1, HW)
    z2 = z_nchw.reshape(B, Cin2, HW)
    w_comb = _build_combined_weight(w1, w2)          # (Cout1+Cout2, 9*(Cin1+Cin2))
    b1_2 = b1.reshape(Cout1, 1)
    masks = _build_border_mask(H, W, x_nchw.dtype)   # (9, HW) compile-time constant

    out = pl.pallas_call(
        _make_kernel(H, W, Cout1, shift),
        out_shape=jax.ShapeDtypeStruct((B, Cout1, HW), x_nchw.dtype),
        grid=(B,),
        in_specs=[
            pl.BlockSpec((None, Cin1, HW), lambda b: (b, 0, 0)),
            pl.BlockSpec((None, Cin2, HW), lambda b: (b, 0, 0)),
            pl.BlockSpec(w_comb.shape, lambda b: (0, 0)),    # weights resident across grid
            pl.BlockSpec((Cout1, 1), lambda b: (0, 0)),      # bias resident across grid
            pl.BlockSpec((KSIZE * KSIZE, HW), lambda b: (0, 0)),  # tap masks resident
        ],
        out_specs=pl.BlockSpec((None, Cout1, HW), lambda b: (b, 0, 0)),
        compiler_params=pltpu.CompilerParams(dimension_semantics=("parallel",)),
    )(x2, z2, w_comb, b1_2, masks)

    return out.reshape(B, Cout1, H, W)


def reference(z_nchw, x_nchw, w1, b1, w2, shift=SHIFT):
    dn = ("NCHW", "OIHW", "NCHW")
    y = lax.conv_general_dilated(x_nchw, w1, (1, 1), "SAME", dimension_numbers=dn)
    y = jnp.maximum(y + b1.reshape(1, -1, 1, 1), 0.0)
    zc = lax.conv_general_dilated(z_nchw, w2, (1, 1), "SAME", dimension_numbers=dn)
    return jnp.tanh(zc) + y + shift


if __name__ == "__main__":
    key = jax.random.PRNGKey(0)
    kx, kz, kw1, kb1, kw2 = jax.random.split(key, 5)

    B, C, H, W = 2, 4, 16, 16  # n_channels == n_inner_channels == 4
    x = jax.random.normal(kx, (B, C, H, W), jnp.float32)
    z = jax.random.normal(kz, (B, C, H, W), jnp.float32)

    # Deterministic parameter init (matches module shapes; weights ~ N(0, 0.01))
    w1 = 0.01 * jax.random.normal(kw1, (C, C, KSIZE, KSIZE), jnp.float32)
    b1 = 0.1 * jax.random.normal(kb1, (C,), jnp.float32)
    w2 = 0.01 * jax.random.normal(kw2, (C, C, KSIZE, KSIZE), jnp.float32)

    out = subhom_forward(z, x, w1, b1, w2)
    jax.block_until_ready(out)

    ref = reference(z, x, w1, b1, w2)
    assert out.shape == (B, C, H, W)
    assert jnp.allclose(out, ref, atol=1e-5, rtol=1e-5), "mismatch vs reference"
    print("KERNEL_OK")
</pallas_src>

<mosaic_0001>
module attributes {stable_mosaic.version = 11 : i64} {
  func.func @kernel(%arg0: i32, %arg1: memref<1x4x256xf32, #tpu.memory_space<vmem>>, %arg2: memref<1x4x256xf32, #tpu.memory_space<vmem>>, %arg3: memref<8x72xf32, #tpu.memory_space<vmem>>, %arg4: memref<4x1xf32, #tpu.memory_space<vmem>>, %arg5: memref<9x256xf32, #tpu.memory_space<vmem>>, %arg6: memref<1x4x256xf32, #tpu.memory_space<vmem>>) attributes {dimension_semantics = [#tpu.dimension_semantics<parallel>], iteration_bounds = array<i64: 2>, scalar_prefetch = 0 : i64, scratch_operands = 0 : i64, tpu.core_type = #tpu.core_type<tc>, window_params = [{transform_indices = @transform_0, window_bounds = array<i64: 1, 4, 256>}, {transform_indices = @transform_1, window_bounds = array<i64: 1, 4, 256>}, {pipeline_mode = #tpu.pipeline_mode<synchronous>, transform_indices = @transform_2, window_bounds = array<i64: 8, 72>}, {pipeline_mode = #tpu.pipeline_mode<synchronous>, transform_indices = @transform_3, window_bounds = array<i64: 4, 1>}, {pipeline_mode = #tpu.pipeline_mode<synchronous>, transform_indices = @transform_4, window_bounds = array<i64: 9, 256>}, {transform_indices = @transform_5, window_bounds = array<i64: 1, 4, 256>}]} {
    %c0 = arith.constant 0 : index
    %c0_0 = arith.constant 0 : index
    %c0_1 = arith.constant 0 : index
    %0 = vector.load %arg1[%c0, %c0_0, %c0_1] : memref<1x4x256xf32, #tpu.memory_space<vmem>>, vector<1x4x256xf32>
    %1 = vector.shape_cast %0 : vector<1x4x256xf32> to vector<4x256xf32>
    %c0_2 = arith.constant 0 : index
    %c0_3 = arith.constant 0 : index
    %c0_4 = arith.constant 0 : index
    %2 = vector.load %arg2[%c0_2, %c0_3, %c0_4] : memref<1x4x256xf32, #tpu.memory_space<vmem>>, vector<1x4x256xf32>
    %3 = vector.shape_cast %2 : vector<1x4x256xf32> to vector<4x256xf32>
    %4 = tpu.concatenate %1, %3 in 0 : vector<4x256xf32>, vector<4x256xf32> -> vector<8x256xf32>
    %c17_i32 = arith.constant 17 : i32
    %5 = tpu.dynamic_rotate %4 by %c17_i32 dim 1 : vector<8x256xf32>, i32 -> vector<8x256xf32>
    %c0_5 = arith.constant 0 : index
    %c0_6 = arith.constant 0 : index
    %6 = vector.load %arg5[%c0_5, %c0_6] : memref<9x256xf32, #tpu.memory_space<vmem>>, vector<1x256xf32>
    %7 = vector.broadcast %6 : vector<1x256xf32> to vector<8x256xf32>
    %8 = arith.mulf %5, %7 : vector<8x256xf32>
    %c16_i32 = arith.constant 16 : i32
    %9 = tpu.dynamic_rotate %4 by %c16_i32 dim 1 : vector<8x256xf32>, i32 -> vector<8x256xf32>
    %c1 = arith.constant 1 : index
    %c0_7 = arith.constant 0 : index
    %10 = vector.load %arg5[%c1, %c0_7] : memref<9x256xf32, #tpu.memory_space<vmem>>, vector<1x256xf32>
    %11 = vector.broadcast %10 : vector<1x256xf32> to vector<8x256xf32>
    %12 = arith.mulf %9, %11 : vector<8x256xf32>
    %c15_i32 = arith.constant 15 : i32
    %13 = tpu.dynamic_rotate %4 by %c15_i32 dim 1 : vector<8x256xf32>, i32 -> vector<8x256xf32>
    %c2 = arith.constant 2 : index
    %c0_8 = arith.constant 0 : index
    %14 = vector.load %arg5[%c2, %c0_8] : memref<9x256xf32, #tpu.memory_space<vmem>>, vector<1x256xf32>
    %15 = vector.broadcast %14 : vector<1x256xf32> to vector<8x256xf32>
    %16 = arith.mulf %13, %15 : vector<8x256xf32>
    %c1_i32 = arith.constant 1 : i32
    %17 = tpu.dynamic_rotate %4 by %c1_i32 dim 1 : vector<8x256xf32>, i32 -> vector<8x256xf32>
    %c3 = arith.constant 3 : index
    %c0_9 = arith.constant 0 : index
    %18 = vector.load %arg5[%c3, %c0_9] : memref<9x256xf32, #tpu.memory_space<vmem>>, vector<1x256xf32>
    %19 = vector.broadcast %18 : vector<1x256xf32> to vector<8x256xf32>
    %20 = arith.mulf %17, %19 : vector<8x256xf32>
    %c255_i32 = arith.constant 255 : i32
    %21 = tpu.dynamic_rotate %4 by %c255_i32 dim 1 : vector<8x256xf32>, i32 -> vector<8x256xf32>
    %c5 = arith.constant 5 : index
    %c0_10 = arith.constant 0 : index
    %22 = vector.load %arg5[%c5, %c0_10] : memref<9x256xf32, #tpu.memory_space<vmem>>, vector<1x256xf32>
    %23 = vector.broadcast %22 : vector<1x256xf32> to vector<8x256xf32>
    %24 = arith.mulf %21, %23 : vector<8x256xf32>
    %c241_i32 = arith.constant 241 : i32
    %25 = tpu.dynamic_rotate %4 by %c241_i32 dim 1 : vector<8x256xf32>, i32 -> vector<8x256xf32>
    %c6 = arith.constant 6 : index
    %c0_11 = arith.constant 0 : index
    %26 = vector.load %arg5[%c6, %c0_11] : memref<9x256xf32, #tpu.memory_space<vmem>>, vector<1x256xf32>
    %27 = vector.broadcast %26 : vector<1x256xf32> to vector<8x256xf32>
    %28 = arith.mulf %25, %27 : vector<8x256xf32>
    %c240_i32 = arith.constant 240 : i32
    %29 = tpu.dynamic_rotate %4 by %c240_i32 dim 1 : vector<8x256xf32>, i32 -> vector<8x256xf32>
    %c7 = arith.constant 7 : index
    %c0_12 = arith.constant 0 : index
    %30 = vector.load %arg5[%c7, %c0_12] : memref<9x256xf32, #tpu.memory_space<vmem>>, vector<1x256xf32>
    %31 = vector.broadcast %30 : vector<1x256xf32> to vector<8x256xf32>
    %32 = arith.mulf %29, %31 : vector<8x256xf32>
    %c239_i32 = arith.constant 239 : i32
    %33 = tpu.dynamic_rotate %4 by %c239_i32 dim 1 : vector<8x256xf32>, i32 -> vector<8x256xf32>
    %c8 = arith.constant 8 : index
    %c0_13 = arith.constant 0 : index
    %34 = vector.load %arg5[%c8, %c0_13] : memref<9x256xf32, #tpu.memory_space<vmem>>, vector<1x256xf32>
    %35 = vector.broadcast %34 : vector<1x256xf32> to vector<8x256xf32>
    %36 = arith.mulf %33, %35 : vector<8x256xf32>
    %37 = tpu.concatenate %8, %12, %16, %20, %4, %24, %28, %32, %36 in 0 : vector<8x256xf32>, vector<8x256xf32>, vector<8x256xf32>, vector<8x256xf32>, vector<8x256xf32>, vector<8x256xf32>, vector<8x256xf32>, vector<8x256xf32>, vector<8x256xf32> -> vector<72x256xf32>
    %c0_14 = arith.constant 0 : index
    %c0_15 = arith.constant 0 : index
    %38 = vector.load %arg3[%c0_14, %c0_15] : memref<8x72xf32, #tpu.memory_space<vmem>>, vector<8x72xf32>
    %cst = arith.constant dense<0.000000e+00> : vector<8x256xf32>
    %39 = tpu.matmul %38, %37, %cst {dimension_numbers = #tpu.dot_dimension_numbers<[1], [0], [0], [1], [0, 0, 1, 1], [], []>} : vector<8x72xf32>, vector<72x256xf32>, vector<8x256xf32> -> vector<8x256xf32>
    %40 = vector.extract_strided_slice %39 {offsets = [0, 0], sizes = [4, 256], strides = [1, 1]} : vector<8x256xf32> to vector<4x256xf32>
    %c0_16 = arith.constant 0 : index
    %c0_17 = arith.constant 0 : index
    %41 = vector.load %arg4[%c0_16, %c0_17] : memref<4x1xf32, #tpu.memory_space<vmem>>, vector<4x1xf32>
    %42 = vector.broadcast %41 : vector<4x1xf32> to vector<4x256xf32>
    %43 = arith.addf %40, %42 : vector<4x256xf32>
    %cst_18 = arith.constant 0.000000e+00 : f32
    %44 = vector.broadcast %cst_18 : f32 to vector<4x256xf32>
    %45 = arith.maximumf %43, %44 : vector<4x256xf32>
    %46 = vector.extract_strided_slice %39 {offsets = [4, 0], sizes = [4, 256], strides = [1, 1]} : vector<8x256xf32> to vector<4x256xf32>
    %47 = math.tanh %46 : vector<4x256xf32>
    %48 = arith.addf %47, %45 : vector<4x256xf32>
    %cst_19 = arith.constant 1.200000e+00 : f32
    %49 = vector.broadcast %cst_19 : f32 to vector<4x256xf32>
    %50 = arith.addf %48, %49 : vector<4x256xf32>
    %c0_20 = arith.constant 0 : index
    %c0_21 = arith.constant 0 : index
    %c0_22 = arith.constant 0 : index
    %51 = vector.load %arg6[%c0_20, %c0_21, %c0_22] : memref<1x4x256xf32, #tpu.memory_space<vmem>>, vector<1x4x256xf32>
    %52 = vector.shape_cast %51 : vector<1x4x256xf32> to vector<4x256xf32>
    %53 = vector.shape_cast %50 : vector<4x256xf32> to vector<1x4x256xf32>
    tpu.vector_store %arg6[%c0_20, %c0_21, %c0_22], %53 {strides = array<i32>} : memref<1x4x256xf32, #tpu.memory_space<vmem>>, vector<1x4x256xf32>,
    return
  }
  func.func @transform_0(%arg0: i32) -> (i32, i32, i32) {
    %c0_i32 = arith.constant 0 : i32
    %c0_i32_0 = arith.constant 0 : i32
    %c0_i32_1 = arith.constant 0 : i32
    return %arg0, %c0_i32, %c0_i32_0 : i32, i32, i32
  }
  func.func @transform_1(%arg0: i32) -> (i32, i32, i32) {
    %c0_i32 = arith.constant 0 : i32
    %c0_i32_0 = arith.constant 0 : i32
    %c0_i32_1 = arith.constant 0 : i32
    return %arg0, %c0_i32, %c0_i32_0 : i32, i32, i32
  }
  func.func @transform_2(%arg0: i32) -> (i32, i32) {
    %c0_i32 = arith.constant 0 : i32
    %c0_i32_0 = arith.constant 0 : i32
    %c0_i32_1 = arith.constant 0 : i32
    return %c0_i32, %c0_i32_0 : i32, i32
  }
  func.func @transform_3(%arg0: i32) -> (i32, i32) {
    %c0_i32 = arith.constant 0 : i32
    %c0_i32_0 = arith.constant 0 : i32
    %c0_i32_1 = arith.constant 0 : i32
    return %c0_i32, %c0_i32_0 : i32, i32
  }
  func.func @transform_4(%arg0: i32) -> (i32, i32) {
    %c0_i32 = arith.constant 0 : i32
    %c0_i32_0 = arith.constant 0 : i32
    %c0_i32_1 = arith.constant 0 : i32
    return %c0_i32, %c0_i32_0 : i32, i32
  }
  func.func @transform_5(%arg0: i32) -> (i32, i32, i32) {
    %c0_i32 = arith.constant 0 : i32
    %c0_i32_0 = arith.constant 0 : i32
    %c0_i32_1 = arith.constant 0 : i32
    return %arg0, %c0_i32, %c0_i32_0 : i32, i32, i32
  }
}

</mosaic_0001>

<llo_original>
// kernel: subhom_forward.1
$region0: #{subhom_forward.1}
  #allocation0 [shape = 'u32[]', space=smem, size = 0x4, offset = 0x4, fixed_abs, tag = 'smem constant byte address 0x4 - core index']
  #allocation1 [shape = 'u32[72,128]{1,0:T(1,128)}', space=vmem, size = 0x9000, scoped, tag = 'internal scratch']
  %s0 = inlined_call_operand.vmem [shape: f32[2,4,256], index: 0, kind: input, shape index: {}]
  %s1 = inlined_call_operand.vmem [shape: f32[2,4,256], index: 1, kind: input, shape index: {}]
  %s2 = inlined_call_operand.vmem [shape: f32[8,72], index: 2, kind: input, shape index: {}]
  %s3 = inlined_call_operand.vmem [shape: f32[4,1], index: 3, kind: input, shape index: {}]
  %s4 = inlined_call_operand.vmem [shape: f32[9,256], index: 4, kind: input, shape index: {}]
  %s5 = inlined_call_operand.vmem [shape: f32[2,4,256], index: 5, kind: output, shape index: {}]
  %s6 = sld [smem:[#allocation0]]
  $region53: #{subhom_forward.1} parent=0
    _
  %s8 = ssub.s32 1, %s6
  %s9 = scalar_select 0, %s8, %s6
  loop: start=0, step=1, limit=4
  $region2: #{subhom_forward.1} parent=0 // loop_pre_header
    _
  $region3: #{subhom_forward.1} parent=0 // loop_header
    %s11 = sphi 0, %s15
    %p12 = scmp.ge.s32.totalorder %s11, 4
    %s21 = sphi 0, %s23
    %s24 = sphi 0, %s21
    %s25 = sphi 0, %s24
    %s41 = sphi 0, %s25
    %s47 = sphi 0, %s49
    %s50 = sphi 0, %s47
    %s51 = sphi 0, %s50
    %s67 = sphi 0, %s51
    %s71 = sphi 0, %s71
    %s73 = sphi 0, %s71
    %s74 = sphi 0, %s73
    %s88 = sphi 0, %s74
    %s92 = sphi 0, %s92
    %s94 = sphi 0, %s92
    %s95 = sphi 0, %s94
    %s109 = sphi 0, %s95
    %s113 = sphi 0, %s113
    %s115 = sphi 0, %s113
    %s116 = sphi 0, %s115
    %s130 = sphi 0, %s116
    %s136 = sphi 0, %s138
    %s139 = sphi 0, %s136
    %s140 = sphi 0, %s139
    %s156 = sphi 0, %s140
  $region4: #{subhom_forward.1} parent=0 // loop_header_branch
    %14 = sbr.rel (%p12) target = $region8
  $region5: #{subhom_forward.1} parent=0 // loop_body
    %s16 = ssub.s32 %s11, 1
    %s17 = ssub.s32 %s11, 2
    %s18 = sadd.s32 %s11, 1
    %s19 = ssub.s32 %s11, %s18
    %p20 = scmp.eq.s32.totalorder %s19, 0
    %s22 = sadd.s32 %s21, 1
    %s23 = scalar_select %p20, %s21, %s22
    %p26 = pneg %p20
    %p27 = scmp.eq.s32.totalorder %s11, 1
    %p28 = por %p26, %p27
    %p29 = scmp.ne.s32.totalorder %s21, %s24
    %p30 = scmp.eq.s32.totalorder %s11, 0
    %p31 = por %p29, %p30
    %p32 = scmp.ne.s32.totalorder %s21, %s24
    %p33 = scmp.eq.s32.totalorder %s16, 1
    %p34 = por %p32, %p33
    %p35 = scmp.ne.s32.totalorder %s24, %s25
    %p36 = scmp.eq.s32.totalorder %s16, 0
    %p37 = por %p35, %p36
    %p38 = scmp.ne.s32.totalorder %s24, %s25
    %p39 = scmp.eq.s32.totalorder %s17, 1
    %p40 = por %p38, %p39
    %p42 = scmp.ne.s32.totalorder %s25, %s41
    %p43 = scmp.eq.s32.totalorder %s17, 0
    %p44 = por %p42, %p43
    %s45 = ssub.s32 %s11, %s18
    %p46 = scmp.eq.s32.totalorder %s45, 0
    %s48 = sadd.s32 %s47, 1
    %s49 = scalar_select %p46, %s47, %s48
    %p52 = pneg %p46
    %p53 = scmp.eq.s32.totalorder %s11, 1
    %p54 = por %p52, %p53
    %p55 = scmp.ne.s32.totalorder %s47, %s50
    %p56 = scmp.eq.s32.totalorder %s11, 0
    %p57 = por %p55, %p56
    %p58 = scmp.ne.s32.totalorder %s47, %s50
    %p59 = scmp.eq.s32.totalorder %s16, 1
    %p60 = por %p58, %p59
    %p61 = scmp.ne.s32.totalorder %s50, %s51
    %p62 = scmp.eq.s32.totalorder %s16, 0
    %p63 = por %p61, %p62
    %p64 = scmp.ne.s32.totalorder %s50, %s51
    %p65 = scmp.eq.s32.totalorder %s17, 1
    %p66 = por %p64, %p65
    %p68 = scmp.ne.s32.totalorder %s51, %s67
    %p69 = scmp.eq.s32.totalorder %s17, 0
    %p70 = por %p68, %p69
    %s72 = sadd.s32 %s71, 1
    %p75 = scmp.eq.s32.totalorder %s11, 1
    %p76 = scmp.ne.s32.totalorder %s71, %s73
    %p77 = scmp.eq.s32.totalorder %s11, 0
    %p78 = por %p76, %p77
    %p79 = scmp.ne.s32.totalorder %s71, %s73
    %p80 = scmp.eq.s32.totalorder %s16, 1
    %p81 = por %p79, %p80
    %p82 = scmp.ne.s32.totalorder %s73, %s74
    %p83 = scmp.eq.s32.totalorder %s16, 0
    %p84 = por %p82, %p83
    %p85 = scmp.ne.s32.totalorder %s73, %s74
    %p86 = scmp.eq.s32.totalorder %s17, 1
    %p87 = por %p85, %p86
    %p89 = scmp.ne.s32.totalorder %s74, %s88
    %p90 = scmp.eq.s32.totalorder %s17, 0
    %p91 = por %p89, %p90
    %s93 = sadd.s32 %s92, 1
    %p96 = scmp.eq.s32.totalorder %s11, 1
    %p97 = scmp.ne.s32.totalorder %s92, %s94
    %p98 = scmp.eq.s32.totalorder %s11, 0
    %p99 = por %p97, %p98
    %p100 = scmp.ne.s32.totalorder %s92, %s94
    %p101 = scmp.eq.s32.totalorder %s16, 1
    %p102 = por %p100, %p101
    %p103 = scmp.ne.s32.totalorder %s94, %s95
    %p104 = scmp.eq.s32.totalorder %s16, 0
    %p105 = por %p103, %p104
    %p106 = scmp.ne.s32.totalorder %s94, %s95
    %p107 = scmp.eq.s32.totalorder %s17, 1
    %p108 = por %p106, %p107
    %p110 = scmp.ne.s32.totalorder %s95, %s109
    %p111 = scmp.eq.s32.totalorder %s17, 0
    %p112 = por %p110, %p111
    %s114 = sadd.s32 %s113, 1
    %p117 = scmp.eq.s32.totalorder %s11, 1
    %p118 = scmp.ne.s32.totalorder %s113, %s115
    %p119 = scmp.eq.s32.totalorder %s11, 0
    %p120 = por %p118, %p119
    %p121 = scmp.ne.s32.totalorder %s113, %s115
    %p122 = scmp.eq.s32.totalorder %s16, 1
    %p123 = por %p121, %p122
    %p124 = scmp.ne.s32.totalorder %s115, %s116
    %p125 = scmp.eq.s32.totalorder %s16, 0
    %p126 = por %p124, %p125
    %p127 = scmp.ne.s32.totalorder %s115, %s116
    %p128 = scmp.eq.s32.totalorder %s17, 1
    %p129 = por %p127, %p128
    %p131 = scmp.ne.s32.totalorder %s116, %s130
    %p132 = scmp.eq.s32.totalorder %s17, 0
    %p133 = por %p131, %p132
    %s134 = ssub.s32 %s11, %s18
    %p135 = scmp.eq.s32.totalorder %s134, 0
    %s137 = sadd.s32 %s136, 1
    %s138 = scalar_select %p135, %s136, %s137
    %p141 = pneg %p135
    %p142 = scmp.eq.s32.totalorder %s11, 1
    %p143 = por %p141, %p142
    %p144 = scmp.ne.s32.totalorder %s136, %s139
    %p145 = scmp.eq.s32.totalorder %s11, 0
    %p146 = por %p144, %p145
    %p147 = scmp.ne.s32.totalorder %s136, %s139
    %p148 = scmp.eq.s32.totalorder %s16, 1
    %p149 = por %p147, %p148
    %p150 = scmp.ne.s32.totalorder %s139, %s140
    %p151 = scmp.eq.s32.totalorder %s16, 0
    %p152 = por %p150, %p151
    %p153 = scmp.ne.s32.totalorder %s139, %s140
    %p154 = scmp.eq.s32.totalorder %s17, 1
    %p155 = por %p153, %p154
    %p157 = scmp.ne.s32.totalorder %s140, %s156
    %p158 = scmp.eq.s32.totalorder %s17, 0
    %p159 = por %p157, %p158
    %p160 = scmp.le.s32.totalorder 1, %s11
    %p161 = scmp.lt.s32.totalorder %s11, 3
    %p162 = pnand %p160, %p161
    %p163 = pneg %p162
    // Predicated region
    $region9: #{subhom_forward.1} parent=5 // pred_check
      _
    $region10: #{subhom_forward.1} parent=5 // pred_check_branch
      %165 = sbr.rel (%p162) target = $region12
    $region11: #{subhom_forward.1} parent=5 // pred_region
      %s166 = ssub.s32 %s11, 1
      // Predicated region
      $region13: #{subhom_forward.1} parent=11 // pred_check
        %p167 = pneg %p84
      $region14: #{subhom_forward.1} parent=11 // pred_check_branch
        %169 = sbr.rel (%p167) target = $region16
      $region15: #{subhom_forward.1} parent=11 // pred_region
        _
      $region16: #{subhom_forward.1} parent=11 // pred_fallthru
        _
      // Predicated region
      $region17: #{subhom_forward.1} parent=11 // pred_check
        %p170 = pneg %p105
      $region18: #{subhom_forward.1} parent=11 // pred_check_branch
        %172 = sbr.rel (%p170) target = $region20
      $region19: #{subhom_forward.1} parent=11 // pred_region
        _
      $region20: #{subhom_forward.1} parent=11 // pred_fallthru
        _
      // Predicated region
      $region21: #{subhom_forward.1} parent=11 // pred_check
        %p173 = pneg %p126
      $region22: #{subhom_forward.1} parent=11 // pred_check_branch
        %175 = sbr.rel (%p173) target = $region24
      $region23: #{subhom_forward.1} parent=11 // pred_region
        _
      $region24: #{subhom_forward.1} parent=11 // pred_fallthru
        _
    $region12: #{subhom_forward.1} parent=5 // pred_fallthru
      _
    %p176 = scmp.lt.s32.totalorder %s11, 2
    // Predicated region
    $region25: #{subhom_forward.1} parent=5 // pred_check
      %p177 = pneg %p176
    $region26: #{subhom_forward.1} parent=5 // pred_check_branch
      %179 = sbr.rel (%p177) target = $region28
    $region27: #{subhom_forward.1} parent=5 // pred_region
      // Predicated region
      $region29: #{subhom_forward.1} parent=27 // pred_check
        %p180 = pneg %p31
      $region30: #{subhom_forward.1} parent=27 // pred_check_branch
        %182 = sbr.rel (%p180) target = $region32
      $region31: #{subhom_forward.1} parent=27 // pred_region
        %p183 = scmp.lt.s32.totalorder %s11, 1
        %s184 = scalar_select %p183, %s11, 1
        %s185 = smul.addr %s184, 2
        %s186 = smul.addr %s185, 4
        %s187 = scalar_lea.vmem %s0, %s186
      $region32: #{subhom_forward.1} parent=27 // pred_fallthru
        _
      // Predicated region
      $region33: #{subhom_forward.1} parent=27 // pred_check
        %p188 = pneg %p57
      $region34: #{subhom_forward.1} parent=27 // pred_check_branch
        %190 = sbr.rel (%p188) target = $region36
      $region35: #{subhom_forward.1} parent=27 // pred_region
        %p191 = scmp.lt.s32.totalorder %s11, 1
        %s192 = scalar_select %p191, %s11, 1
        %s193 = smul.addr %s192, 2
        %s194 = smul.addr %s193, 4
        %s195 = scalar_lea.vmem %s1, %s194
      $region36: #{subhom_forward.1} parent=27 // pred_fallthru
        _
    $region28: #{subhom_forward.1} parent=5 // pred_fallthru
      _
    %p196 = scmp.le.s32.totalorder 1, %s11
    %p197 = scmp.lt.s32.totalorder %s11, 3
    %p198 = pnand %p196, %p197
    %p199 = pneg %p198
    // Predicated region
    $region37: #{subhom_forward.1} parent=5 // pred_check
      _
    $region38: #{subhom_forward.1} parent=5 // pred_check_branch
      %201 = sbr.rel (%p198) target = $region40
    $region39: #{subhom_forward.1} parent=5 // pred_region
      %s202 = ssub.s32 %s11, 1
      %p203 = scmp.lt.s32.totalorder %s16, 1
      %s204 = scalar_select %p203, %s16, 1
      %s205 = smul.addr %s204, 2
      %s206 = smul.addr %s205, 4
      %s207 = scalar_lea.vmem %s0, %s206
      %p208 = pneg %p37
      %p209 = pneg %p34
      %p210 = scmp.lt.s32.totalorder %s16, 1
      %s211 = scalar_select %p210, %s16, 1
      %s212 = smul.addr %s211, 2
      %s213 = smul.addr %s212, 4
      %s214 = scalar_lea.vmem %s1, %s213
      %p215 = pneg %p63
      %p216 = pneg %p60
      %p217 = pneg %p84
      %p218 = pneg %p81
      %p219 = pneg %p105
      %p220 = pneg %p102
      %p221 = pneg %p126
      %p222 = pneg %p123
      %p223 = pneg %p152
      %p224 = pneg %p149
      %p225 = scmp.lt.s32.totalorder %s16, 1
      %s226 = scalar_select %p225, %s16, 1
      %s227 = smul.addr %s226, 2
      %s228 = smul.addr %s227, 4
      %s229 = scalar_lea.vmem %s5, %s228
      %p230 = scmp.lt.s32.totalorder %s16, 1
      %s231 = scalar_select %p230, %s16, 1
      %s232 = smul.addr %s231, 2
      %s233 = smul.addr %s232, 4
      %s234 = scalar_lea.vmem %s0, %s233
      %p235 = scmp.lt.s32.totalorder %s16, 1
      %s236 = scalar_select %p235, %s16, 1
      %s237 = smul.addr %s236, 2
      %s238 = smul.addr %s237, 4
      %s239 = scalar_lea.vmem %s1, %s238
      %p240 = scmp.lt.s32.totalorder %s16, 1
      %s241 = scalar_select %p240, %s16, 1
      %s242 = smul.addr %s241, 2
      %s243 = smul.addr %s242, 4
      %s244 = scalar_lea.vmem %s5, %s243
      %v245 = vld [vmem:[%s234] sm:$0xff]
      %v246 = vld [vmem:[%s239] sm:$0xff]
      %248 = vst [vmem:[#allocation1] ss:$2 sm:$0xff] %v245
      %v249 = vld.sshfl [vmem:[#allocation1] sm:$0xff pattern:$0x75316420]
      %v250 = vld.sshfl [vmem:[#allocation1 + $0x8] sm:$0xff pattern:$0x75316420]
      %s254 = scalar_lea.vmem [#allocation1], 1
      %255 = vst [vmem:[%s254] ss:$2 sm:$0xff] %v246
      %v256 = vld.sshfl [vmem:[#allocation1] sm:$0xff pattern:$0x75316420]
      %v257 = vld.sshfl [vmem:[#allocation1 + $0x8] sm:$0xff pattern:$0x75316420]
      %vm260 = vcmask 1043456
      %v261 = vsel %vm260, %v249, %v256
      %v262 = vsel %vm260, %v250, %v257
      %263 = vrot.lane.b32.xlu0 %v261, 17
      %v264 = vpop.permute.xlu0 %263
      %265 = vrot.lane.b32.xlu0 %v262, 17
      %v266 = vpop.permute.xlu0 %265
      %v267 = vlaneseq
      %v268 = vand.u32 %v267, 127
      %vm269 = vcmp.lt.s32.totalorder %v268, 17
      %v270 = vsel %vm269, %v264, %v266
      %v271 = vsel %vm269, %v266, %v264
      %v272 = vld [vmem:[%s4] ss:$8 sm:$0x3]
      %v274 = vperm.slane %v272, 0
      %v275 = vperm.slane %v272, 1
      %v278 = vmul.f32 %v271, %v274
      %v279 = vmul.f32 %v270, %v275
      %280 = vrot.lane.b32.xlu0 %v261, 16
      %v281 = vpop.permute.xlu0 %280
      %282 = vrot.lane.b32.xlu0 %v262, 16
      %v283 = vpop.permute.xlu0 %282
      %vm284 = vcmp.lt.s32.totalorder %v268, 16
      %v285 = vsel %vm284, %v281, %v283
      %v286 = vsel %vm284, %v283, %v281
      %s287 = scalar_lea.vmem %s4, 1
      %v288 = vld [vmem:[%s287] ss:$8 sm:$0x3]
      %v290 = vperm.slane %v288, 0
      %v291 = vperm.slane %v288, 1
      %v294 = vmul.f32 %v286, %v290
      %v295 = vmul.f32 %v285, %v291
      %296 = vrot.lane.b32.xlu0 %v261, 15
      %v297 = vpop.permute.xlu0 %296
      %298 = vrot.lane.b32.xlu0 %v262, 15
      %v299 = vpop.permute.xlu0 %298
      %vm300 = vcmp.lt.s32.totalorder %v268, 15
      %v301 = vsel %vm300, %v297, %v299
      %v302 = vsel %vm300, %v299, %v297
      %s303 = scalar_lea.vmem %s4, 2
      %v304 = vld [vmem:[%s303] ss:$8 sm:$0x3]
      %v306 = vperm.slane %v304, 0
      %v307 = vperm.slane %v304, 1
      %v310 = vmul.f32 %v302, %v306
      %v311 = vmul.f32 %v301, %v307
      %312 = vrot.lane.b32.xlu0 %v261, 1
      %v313 = vpop.permute.xlu0 %312
      %314 = vrot.lane.b32.xlu0 %v262, 1
      %v315 = vpop.permute.xlu0 %314
      %vm316 = vcmp.lt.s32.totalorder %v268, 1
      %v317 = vsel %vm316, %v313, %v315
      %v318 = vsel %vm316, %v315, %v313
      %s319 = scalar_lea.vmem %s4, 3
      %v320 = vld [vmem:[%s319] ss:$8 sm:$0x3]
      %v322 = vperm.slane %v320, 0
      %v323 = vperm.slane %v320, 1
      %v326 = vmul.f32 %v318, %v322
      %v327 = vmul.f32 %v317, %v323
      %328 = vrot.lane.b32.xlu0 %v261, 127
      %v329 = vpop.permute.xlu0 %328
      %330 = vrot.lane.b32.xlu0 %v262, 127
      %v331 = vpop.permute.xlu0 %330
      %vm332 = vcmp.lt.s32.totalorder %v268, 127
      %v333 = vsel %vm332, %v329, %v331
      %v334 = vsel %vm332, %v331, %v329
      %s335 = scalar_lea.vmem %s4, 5
      %v336 = vld [vmem:[%s335] ss:$8 sm:$0x3]
      %v338 = vperm.slane %v336, 0
      %v339 = vperm.slane %v336, 1
      %v342 = vmul.f32 %v333, %v338
      %v343 = vmul.f32 %v334, %v339
      %344 = vrot.lane.b32.xlu0 %v261, 113
      %v345 = vpop.permute.xlu0 %344
      %346 = vrot.lane.b32.xlu0 %v262, 113
      %v347 = vpop.permute.xlu0 %346
      %vm348 = vcmp.lt.s32.totalorder %v268, 113
      %v349 = vsel %vm348, %v345, %v347
      %v350 = vsel %vm348, %v347, %v345
      %s351 = scalar_lea.vmem %s4, 6
      %v352 = vld [vmem:[%s351] ss:$8 sm:$0x3]
      %v354 = vperm.slane %v352, 0
      %v355 = vperm.slane %v352, 1
      %v358 = vmul.f32 %v349, %v354
      %v359 = vmul.f32 %v350, %v355
      %360 = vrot.lane.b32.xlu0 %v261, 112
      %v361 = vpop.permute.xlu0 %360
      %362 = vrot.lane.b32.xlu0 %v262, 112
      %v363 = vpop.permute.xlu0 %362
      %vm364 = vcmp.lt.s32.totalorder %v268, 112
      %v365 = vsel %vm364, %v361, %v363
      %v366 = vsel %vm364, %v363, %v361
      %s367 = scalar_lea.vmem %s4, 7
      %v368 = vld [vmem:[%s367] ss:$8 sm:$0x3]
      %v370 = vperm.slane %v368, 0
      %v371 = vperm.slane %v368, 1
      %v374 = vmul.f32 %v365, %v370
      %v375 = vmul.f32 %v366, %v371
      %376 = vrot.lane.b32.xlu0 %v261, 111
      %v377 = vpop.permute.xlu0 %376
      %378 = vrot.lane.b32.xlu0 %v262, 111
      %v379 = vpop.permute.xlu0 %378
      %vm380 = vcmp.lt.s32.totalorder %v268, 111
      %v381 = vsel %vm380, %v377, %v379
      %v382 = vsel %vm380, %v379, %v377
      %s383 = scalar_lea.vmem %s4, 16
      %v384 = vld [vmem:[%s383] ss:$8 sm:$0x3]
      %v386 = vperm.slane %v384, 0
      %v387 = vperm.slane %v384, 1
      %v390 = vmul.f32 %v381, %v386
      %v391 = vmul.f32 %v382, %v387
      %v392 = vld [vmem:[%s2] sm:$0xff]
      %vm393 = vcmask 588800
      %v395 = vsel %vm393, %v392, 0
      %397 = vmatpush.msra.mxu0 0.0
      %398 = vmatpush.msra.mxu0 0.0
      %399 = vmatpush.msra.mxu0 0.0
      %400 = vmatpush.msra.mxu0 0.0
      %401 = vmatpush.msra.mxu0 0.0
      %402 = vmatpush.msra.mxu0 0.0
      %403 = vmatpush.msra.mxu0 0.0
      %404 = vmatpush.msra.mxu0 %v390
      %405 = vmatpush.msra.mxu0 %v374
      %406 = vmatpush.msra.mxu0 %v358
      %407 = vmatpush.msra.mxu0 %v342
      %408 = vmatpush.msra.mxu0 %v261
      %409 = vmatpush.msra.mxu0 %v326
      %410 = vmatpush.msra.mxu0 %v310
      %411 = vmatpush.msra.mxu0 %v294
      %412 = vmatpush.msra.mxu0 %v278
      %413 = vmatmul.f32.gmra.mxu0 %v395
      %v414 = vpop.f32.mrf.mxu0
      %v415 = vadd.f32 0.0, %v414
      %416 = vdwg.mxu0
      %417 = vmatpush.msra.mxu0 0.0
      %418 = vmatpush.msra.mxu0 0.0
      %419 = vmatpush.msra.mxu0 0.0
      %420 = vmatpush.msra.mxu0 0.0
      %421 = vmatpush.msra.mxu0 0.0
      %422 = vmatpush.msra.mxu0 0.0
      %423 = vmatpush.msra.mxu0 0.0
      %424 = vmatpush.msra.mxu0 %v391
      %425 = vmatpush.msra.mxu0 %v375
      %426 = vmatpush.msra.mxu0 %v359
      %427 = vmatpush.msra.mxu0 %v343
      %428 = vmatpush.msra.mxu0 %v262
      %429 = vmatpush.msra.mxu0 %v327
      %430 = vmatpush.msra.mxu0 %v311
      %431 = vmatpush.msra.mxu0 %v295
      %432 = vmatpush.msra.mxu0 %v279
      %433 = vmatmul.f32.gmra.mxu0 %v395
      %v434 = vpop.f32.mrf.mxu0
      %v435 = vadd.f32 0.0, %v434
      %436 = vdwg.mxu0
      %v437 = vld [vmem:[%s3] sm:$0xf]
      %439 = vset.pattern.permute.xlu0 0
      %440 = vperm.xlu0 %439, %v437
      %v441 = vpop.permute.xlu0 %440
      %v443 = vadd.f32 %v415, %v441
      %v444 = vadd.f32 %v435, %v441
      %v445 = vmax.f32 %v443, 0.0
      %v446 = vmax.f32 %v444, 0.0
      %v447 = vtanh.pop %v415
      %v448 = vtanh.pop %v435
      %v451 = vrot.slane %v445, 4
      %v452 = vrot.slane %v446, 4
      %v455 = vadd.f32 %v447, %v451
      %v456 = vadd.f32 %v448, %v452
      %v457 = vadd.f32 %v455, 1.2
      %v458 = vadd.f32 %v456, 1.2
      %461 = vst.sshfl [vmem:[#allocation1] sm:$0xff pattern:$0x75316420] %v457
      %462 = vst.sshfl [vmem:[#allocation1 + $0x8] sm:$0xff pattern:$0x75316420] %v458
      %s463 = scalar_lea.vmem [#allocation1], 1
      %v464 = vld [vmem:[%s463] ss:$2 sm:$0xff]
      %466 = vst [vmem:[%s244] sm:$0xff] %v464
      %p467 = scmp.lt.s32.totalorder %s16, 1
      %s468 = scalar_select %p467, %s16, 1
      %s469 = smul.addr %s468, 2
      %s470 = smul.addr %s469, 4
      %s471 = scalar_lea.vmem %s5, %s470
      // Predicated region
      $region41: #{subhom_forward.1} parent=39 // pred_check
        %p472 = pneg %p149
      $region42: #{subhom_forward.1} parent=39 // pred_check_branch
        %474 = sbr.rel (%p472) target = $region44
      $region43: #{subhom_forward.1} parent=39 // pred_region
        _
      $region44: #{subhom_forward.1} parent=39 // pred_fallthru
        _
    $region40: #{subhom_forward.1} parent=5 // pred_fallthru
      _
    %p475 = scmp.le.s32.totalorder 2, %s11
    // Predicated region
    $region45: #{subhom_forward.1} parent=5 // pred_check
      %p476 = pneg %p475
    $region46: #{subhom_forward.1} parent=5 // pred_check_branch
      %478 = sbr.rel (%p476) target = $region48
    $region47: #{subhom_forward.1} parent=5 // pred_region
      %s479 = ssub.s32 %s11, 2
      // Predicated region
      $region49: #{subhom_forward.1} parent=47 // pred_check
        %p480 = pneg %p155
      $region50: #{subhom_forward.1} parent=47 // pred_check_branch
        %482 = sbr.rel (%p480) target = $region52
      $region51: #{subhom_forward.1} parent=47 // pred_region
        %p483 = scmp.lt.s32.totalorder %s17, 1
        %s484 = scalar_select %p483, %s17, 1
        %s485 = smul.addr %s484, 2
        %s486 = smul.addr %s485, 4
        %s487 = scalar_lea.vmem %s5, %s486
      $region52: #{subhom_forward.1} parent=47 // pred_fallthru
        _
    $region48: #{subhom_forward.1} parent=5 // pred_fallthru
      _
  $region6: #{subhom_forward.1} parent=0 // loop_footer
    %s15 = sadd.s32 1, %s11
  $region7: #{subhom_forward.1} parent=0 // loop_footer_branch
    %10 = sbr.rel target = $region3
  $region8: #{subhom_forward.1} parent=0 // loop_exit
    _

</llo_original>
